<compile_context>
chip_gen: v7x
topology: tpu7x:2x2x1
jax: 0.10.0
libtpu: 0.0.40
codegen_flags: <defaults>
</compile_context>

<pallas_src>
import jax
import jax.numpy as jnp
from jax.experimental import pallas as pl
from jax.experimental.pallas import tpu as pltpu


def _pela_kernel(x_ref, u_ref, v_ref, b_ref, o_ref):
    # Low-rank path: t = x @ U  -> (tm, rank), f32 accumulation on the MXU.
    t = jnp.dot(x_ref[...], u_ref[...], preferred_element_type=jnp.float32)
    # y = t @ V_tile  -> (tm, tn), f32 accumulation.
    y = jnp.dot(t, v_ref[...], preferred_element_type=jnp.float32)
    # Bias add + cast in f32 (avoids bf16 VPU emulation on v5e).
    o_ref[...] = (y + b_ref[...].astype(jnp.float32)).astype(o_ref.dtype)


def quality_based_pela_forward(x, U, V, bias=None, *, tm=128, tn=128):
    """x: (..., d_in), U: (d_in, rank), V: (rank, d_out), bias: (d_out,) or None."""
    d_in, rank = U.shape
    rank_v, d_out = V.shape
    assert rank == rank_v
    assert x.shape[-1] == d_in

    if bias is None:
        bias = jnp.zeros((d_out,), dtype=x.dtype)

    lead_shape = x.shape[:-1]
    x2d = x.reshape(-1, d_in)
    M = x2d.shape[0]

    # Pad rows to a multiple of tm (tile chosen for the MXU, not divisibility).
    M_pad = pl.cdiv(M, tm) * tm
    if M_pad != M:
        x2d = jnp.pad(x2d, ((0, M_pad - M), (0, 0)))

    # Pad d_out to a multiple of tn -> lane-dense (unmasked) output stores.
    N_pad = pl.cdiv(d_out, tn) * tn
    Vp = V if N_pad == d_out else jnp.pad(V, ((0, 0), (0, N_pad - d_out)))
    bp = bias if N_pad == d_out else jnp.pad(bias, (0, N_pad - d_out))
    b2d = bp.reshape(1, N_pad)

    grid = (M_pad // tm, N_pad // tn)

    out2d = pl.pallas_call(
        _pela_kernel,
        out_shape=jax.ShapeDtypeStruct((M_pad, N_pad), x.dtype),
        grid_spec=pltpu.PrefetchScalarGridSpec(
            num_scalar_prefetch=0,
            grid=grid,
            in_specs=[
                pl.BlockSpec((tm, d_in), lambda i, j: (i, 0)),    # x row tile
                pl.BlockSpec((d_in, rank), lambda i, j: (0, 0)),  # U (resident)
                pl.BlockSpec((rank, tn), lambda i, j: (0, j)),    # V column tile
                pl.BlockSpec((1, tn), lambda i, j: (0, j)),       # bias tile
            ],
            out_specs=pl.BlockSpec((tm, tn), lambda i, j: (i, j)),
        ),
        compiler_params=pltpu.CompilerParams(
            dimension_semantics=("parallel", "parallel"),
            vmem_limit_bytes=64 * 1024 * 1024,
        ),
    )(x2d, U, Vp, b2d)

    out2d = out2d[:M, :d_out]
    return out2d.reshape(*lead_shape, d_out)


if __name__ == "__main__":
    # Deterministic synthetic parameters (no checkpoint load).
    # original_shape = (d_in, d_out) = (32, 32), rank = 8
    batch, seq = 2, 8
    d_in, d_out, rank = 32, 32, 8

    key = jax.random.PRNGKey(0)
    kx, ku, kv, kb = jax.random.split(key, 4)

    x = jax.random.normal(kx, (batch, seq, d_in), dtype=jnp.float32)
    U = jax.random.normal(ku, (d_in, rank), dtype=jnp.float32) * 0.05
    V = jax.random.normal(kv, (rank, d_out), dtype=jnp.float32) * 0.05
    bias = jax.random.normal(kb, (d_out,), dtype=jnp.float32) * 0.01

    y = quality_based_pela_forward(x, U, V, bias)
    y = jax.block_until_ready(y)

    # Reference check (pure JAX, same math as the PyTorch module).
    y_ref = x @ (U @ V) + bias
    assert y.shape == (batch, seq, d_out)
    assert jnp.allclose(y, y_ref, atol=1e-4, rtol=1e-4)

    print("KERNEL_OK")
</pallas_src>

<mosaic_0001>
module attributes {stable_mosaic.version = 11 : i64} {
  func.func @_pela_kernel(%arg0: i32, %arg1: i32, %arg2: memref<128x32xf32, #tpu.memory_space<vmem>>, %arg3: memref<32x8xf32, #tpu.memory_space<vmem>>, %arg4: memref<8x128xf32, #tpu.memory_space<vmem>>, %arg5: memref<1x128xf32, #tpu.memory_space<vmem>>, %arg6: memref<128x128xf32, #tpu.memory_space<vmem>>) attributes {dimension_semantics = [#tpu.dimension_semantics<parallel>, #tpu.dimension_semantics<parallel>], iteration_bounds = array<i64: 1, 1>, scalar_prefetch = 0 : i64, scratch_operands = 0 : i64, tpu.core_type = #tpu.core_type<tc>, window_params = [{transform_indices = @transform_0, window_bounds = array<i64: 128, 32>}, {pipeline_mode = #tpu.pipeline_mode<synchronous>, transform_indices = @transform_1, window_bounds = array<i64: 32, 8>}, {transform_indices = @transform_2, window_bounds = array<i64: 8, 128>}, {transform_indices = @transform_3, window_bounds = array<i64: 1, 128>}, {transform_indices = @transform_4, window_bounds = array<i64: 128, 128>}]} {
    %c0 = arith.constant 0 : index
    %c0_0 = arith.constant 0 : index
    %0 = vector.load %arg2[%c0, %c0_0] : memref<128x32xf32, #tpu.memory_space<vmem>>, vector<128x32xf32>
    %c0_1 = arith.constant 0 : index
    %c0_2 = arith.constant 0 : index
    %1 = vector.load %arg3[%c0_1, %c0_2] : memref<32x8xf32, #tpu.memory_space<vmem>>, vector<32x8xf32>
    %cst = arith.constant dense<0.000000e+00> : vector<128x8xf32>
    %2 = tpu.matmul %0, %1, %cst {dimension_numbers = #tpu.dot_dimension_numbers<[1], [0], [0], [1], [0, 0, 1, 1], [], []>} : vector<128x32xf32>, vector<32x8xf32>, vector<128x8xf32> -> vector<128x8xf32>
    %c0_3 = arith.constant 0 : index
    %c0_4 = arith.constant 0 : index
    %3 = vector.load %arg4[%c0_3, %c0_4] : memref<8x128xf32, #tpu.memory_space<vmem>>, vector<8x128xf32>
    %cst_5 = arith.constant dense<0.000000e+00> : vector<128x128xf32>
    %4 = tpu.matmul %2, %3, %cst_5 {dimension_numbers = #tpu.dot_dimension_numbers<[1], [0], [0], [1], [0, 0, 1, 1], [], []>} : vector<128x8xf32>, vector<8x128xf32>, vector<128x128xf32> -> vector<128x128xf32>
    %c0_6 = arith.constant 0 : index
    %c0_7 = arith.constant 0 : index
    %5 = vector.load %arg5[%c0_6, %c0_7] : memref<1x128xf32, #tpu.memory_space<vmem>>, vector<1x128xf32>
    %6 = vector.broadcast %5 : vector<1x128xf32> to vector<128x128xf32>
    %7 = arith.addf %4, %6 : vector<128x128xf32>
    %c0_8 = arith.constant 0 : index
    %c0_9 = arith.constant 0 : index
    %8 = vector.load %arg6[%c0_8, %c0_9] : memref<128x128xf32, #tpu.memory_space<vmem>>, vector<128x128xf32>
    tpu.vector_store %arg6[%c0_8, %c0_9], %7 {strides = array<i32>} : memref<128x128xf32, #tpu.memory_space<vmem>>, vector<128x128xf32>,
    return
  }
  func.func @transform_0(%arg0: i32, %arg1: i32) -> (i32, i32) {
    %c0_i32 = arith.constant 0 : i32
    %c0_i32_0 = arith.constant 0 : i32
    return %arg0, %c0_i32 : i32, i32
  }
  func.func @transform_1(%arg0: i32, %arg1: i32) -> (i32, i32) {
    %c0_i32 = arith.constant 0 : i32
    %c0_i32_0 = arith.constant 0 : i32
    %c0_i32_1 = arith.constant 0 : i32
    return %c0_i32, %c0_i32_0 : i32, i32
  }
  func.func @transform_2(%arg0: i32, %arg1: i32) -> (i32, i32) {
    %c0_i32 = arith.constant 0 : i32
    %c0_i32_0 = arith.constant 0 : i32
    return %c0_i32, %arg1 : i32, i32
  }
  func.func @transform_3(%arg0: i32, %arg1: i32) -> (i32, i32) {
    %c0_i32 = arith.constant 0 : i32
    %c0_i32_0 = arith.constant 0 : i32
    return %c0_i32, %arg1 : i32, i32
  }
  func.func @transform_4(%arg0: i32, %arg1: i32) -> (i32, i32) {
    %c0_i32 = arith.constant 0 : i32
    return %arg0, %arg1 : i32, i32
  }
}

</mosaic_0001>

<llo_original>
// kernel: tpu_custom_call.1
$region0: #{tpu_custom_call.1}
  #allocation0 [shape = 'u32[]', space=smem, size = 0x4, offset = 0x4, fixed_abs, tag = 'smem constant byte address 0x4 - core index']
  #allocation1 [shape = 'u32[144,128]{1,0:T(1,128)}', space=vmem, size = 0x12000, scoped, tag = 'internal scratch']
  %s0 = inlined_call_operand.hbm [shape: f32[128,32], index: 0, kind: input, shape index: {}]
  %s1 = inlined_call_operand.hbm [shape: f32[32,8], index: 1, kind: input, shape index: {}]
  %s2 = inlined_call_operand.hbm [shape: f32[8,128], index: 2, kind: input, shape index: {}]
  %s3 = inlined_call_operand.hbm [shape: f32[1,128], index: 3, kind: input, shape index: {}]
  %s4 = inlined_call_operand.hbm [shape: f32[128,128], index: 4, kind: output, shape index: {}]
  %s5 = sld [smem:[#allocation0]]
  $region42: #{tpu_custom_call.1} parent=0
    _
  %s7 = ssub.s32 1, %s5
  %s8 = scalar_select 0, %s7, %s5
  $region1: #{tpu_custom_call.1} parent=0
    #allocation2 [shape = 'u8[65536]{0}', space=vmem, size = 0x10000, scoped, tag = 'input window, operand 0, single buffered']
    #allocation3 [shape = 's32[1]{0}', space=sflag, size = 0x4, scoped, tag = 'scoped memory for tpu_custom_call.1']
    #allocation4 [shape = 's32[1]{0}', space=sflag, size = 0x4, scoped, tag = 'scoped memory for tpu_custom_call.1']
    #allocation5 [shape = 'u8[16384]{0}', space=vmem, size = 0x4000, scoped, tag = 'input window, operand 1, single buffered']
    #allocation6 [shape = 's32[1]{0}', space=sflag, size = 0x4, scoped, tag = 'scoped memory for tpu_custom_call.1']
    #allocation7 [shape = 'u8[4096]{0}', space=vmem, size = 0x1000, scoped, tag = 'input window, operand 2, single buffered']
    #allocation8 [shape = 'u8[512]{0}', space=vmem, size = 0x400, scoped, tag = 'input window, operand 3, single buffered']
    #allocation9 [shape = 's32[1]{0}', space=sflag, size = 0x4, scoped, tag = 'scoped memory for tpu_custom_call.1']
    #allocation10 [shape = 'u8[65536]{0}', space=vmem, size = 0x10000, scoped, tag = 'output window, operand 0, single buffered']
    %9 = vsyncpa [#allocation3], 0
    %10 = vsyncpa [#allocation6], 0
    %11 = vsyncpa [#allocation9], 0
    %12 = vsyncpa [#allocation4], 0
    // Predicated region
    $region2: #{tpu_custom_call.1} parent=1 // pred_check
      _
    $region3: #{tpu_custom_call.1} parent=1 // pred_check_branch
      %14 = sbr.rel (0) target = $region5
    $region4: #{tpu_custom_call.1} parent=1 // pred_region
      %s16 = ssub.s32 2048, 2048
      %17 = vsyncadd [#allocation3], %s16
      %s18 = sshll.u32 [#allocation2], 4
      %s19 = int_to_ptr.vmem [resolvable:$true] %s18
      %24 = dma.hbm_to_vmem [thread:$0]  %s0, 2048, %s19, [#allocation3], 128, 128, 8
    $region5: #{tpu_custom_call.1} parent=1 // pred_fallthru
      _
    // Predicated region
    $region6: #{tpu_custom_call.1} parent=1 // pred_check
      _
    $region7: #{tpu_custom_call.1} parent=1 // pred_check_branch
      %26 = sbr.rel (0) target = $region9
    $region8: #{tpu_custom_call.1} parent=1 // pred_region
      %s28 = ssub.s32 512, 512
      %29 = vsyncadd [#allocation6], %s28
      %s30 = sshll.u32 [#allocation5], 4
      %s31 = int_to_ptr.vmem [resolvable:$true] %s30
      %36 = dma.hbm_to_vmem [thread:$0]  %s1, 512, %s31, [#allocation6], 128, 128, 8
    $region9: #{tpu_custom_call.1} parent=1 // pred_fallthru
      _
    // Predicated region
    $region10: #{tpu_custom_call.1} parent=1 // pred_check
      _
    $region11: #{tpu_custom_call.1} parent=1 // pred_check_branch
      %38 = sbr.rel (0) target = $region13
    $region12: #{tpu_custom_call.1} parent=1 // pred_region
      %s40 = ssub.s32 128, 128
      %41 = vsyncadd [#allocation6], %s40
      %s43 = sshll.u32 [#allocation7], 4
      %s44 = int_to_ptr.vmem [resolvable:$true] %s43
      %46 = dma.hbm_to_vmem [thread:$0]  %s2, 128, %s44, [#allocation6]
    $region13: #{tpu_custom_call.1} parent=1 // pred_fallthru
      _
    // Predicated region
    $region14: #{tpu_custom_call.1} parent=1 // pred_check
      _
    $region15: #{tpu_custom_call.1} parent=1 // pred_check_branch
      %48 = sbr.rel (0) target = $region17
    $region16: #{tpu_custom_call.1} parent=1 // pred_region
      %s50 = ssub.s32 16, 16
      %51 = vsyncadd [#allocation9], %s50
      %s53 = sshll.u32 [#allocation8], 4
      %s54 = int_to_ptr.vmem [resolvable:$true] %s53
      %56 = dma.hbm_to_vmem [thread:$0]  %s3, 16, %s54, [#allocation9]
    $region17: #{tpu_custom_call.1} parent=1 // pred_fallthru
      _
    // Predicated region
    $region18: #{tpu_custom_call.1} parent=1 // pred_check
      _
    $region19: #{tpu_custom_call.1} parent=1 // pred_check_branch
      %58 = sbr.rel (0) target = $region21
    $region20: #{tpu_custom_call.1} parent=1 // pred_region
      %59 = dma.done [#allocation3], 2048
    $region21: #{tpu_custom_call.1} parent=1 // pred_fallthru
      _
    // Predicated region
    $region22: #{tpu_custom_call.1} parent=1 // pred_check
      _
    $region23: #{tpu_custom_call.1} parent=1 // pred_check_branch
      %61 = sbr.rel (0) target = $region25
    $region24: #{tpu_custom_call.1} parent=1 // pred_region
      %62 = dma.done [#allocation6], 512
    $region25: #{tpu_custom_call.1} parent=1 // pred_fallthru
      _
    // Predicated region
    $region26: #{tpu_custom_call.1} parent=1 // pred_check
      _
    $region27: #{tpu_custom_call.1} parent=1 // pred_check_branch
      %64 = sbr.rel (0) target = $region29
    $region28: #{tpu_custom_call.1} parent=1 // pred_region
      %65 = dma.done [#allocation6], 128
    $region29: #{tpu_custom_call.1} parent=1 // pred_fallthru
      _
    // Predicated region
    $region30: #{tpu_custom_call.1} parent=1 // pred_check
      _
    $region31: #{tpu_custom_call.1} parent=1 // pred_check_branch
      %67 = sbr.rel (0) target = $region33
    $region32: #{tpu_custom_call.1} parent=1 // pred_region
      %68 = dma.done [#allocation9], 16
    $region33: #{tpu_custom_call.1} parent=1 // pred_fallthru
      _
    %v69 = vld [vmem:[#allocation2] sm:$0xff]
    %v70 = vld [vmem:[#allocation2 + $0x8] sm:$0xff]
    %v71 = vld [vmem:[#allocation2 + $0x10] sm:$0xff]
    %v72 = vld [vmem:[#allocation2 + $0x18] sm:$0xff]
    %v73 = vld [vmem:[#allocation2 + $0x20] sm:$0xff]
    %v74 = vld [vmem:[#allocation2 + $0x28] sm:$0xff]
    %v75 = vld [vmem:[#allocation2 + $0x30] sm:$0xff]
    %v76 = vld [vmem:[#allocation2 + $0x38] sm:$0xff]
    %v77 = vld [vmem:[#allocation2 + $0x40] sm:$0xff]
    %v78 = vld [vmem:[#allocation2 + $0x48] sm:$0xff]
    %v79 = vld [vmem:[#allocation2 + $0x50] sm:$0xff]
    %v80 = vld [vmem:[#allocation2 + $0x58] sm:$0xff]
    %v81 = vld [vmem:[#allocation2 + $0x60] sm:$0xff]
    %v82 = vld [vmem:[#allocation2 + $0x68] sm:$0xff]
    %v83 = vld [vmem:[#allocation2 + $0x70] sm:$0xff]
    %v84 = vld [vmem:[#allocation2 + $0x78] sm:$0xff]
    %v85 = vld [vmem:[#allocation5] sm:$0xff]
    %v86 = vld [vmem:[#allocation5 + $0x8] sm:$0xff]
    %v87 = vld [vmem:[#allocation5 + $0x10] sm:$0xff]
    %v88 = vld [vmem:[#allocation5 + $0x18] sm:$0xff]
    %vm89 = vcmask 261120
    %v91 = vsel %vm89, %v69, 0
    %v94 = vsel %vm89, %v70, 0
    %v97 = vsel %vm89, %v71, 0
    %v100 = vsel %vm89, %v72, 0
    %v103 = vsel %vm89, %v73, 0
    %v106 = vsel %vm89, %v74, 0
    %v109 = vsel %vm89, %v75, 0
    %v112 = vsel %vm89, %v76, 0
    %v115 = vsel %vm89, %v77, 0
    %v118 = vsel %vm89, %v78, 0
    %v121 = vsel %vm89, %v79, 0
    %v124 = vsel %vm89, %v80, 0
    %v127 = vsel %vm89, %v81, 0
    %v130 = vsel %vm89, %v82, 0
    %v133 = vsel %vm89, %v83, 0
    %v136 = vsel %vm89, %v84, 0
    %138 = vmatprep.subr.mxu0 0.0
    %139 = vmatpush1.msra.mxu0 %v85
    %140 = vmatprep.subr.mxu0 0.0
    %141 = vmatpush1.msra.mxu0 %v86
    %142 = vmatprep.subr.mxu0 0.0
    %143 = vmatpush1.msra.mxu0 %v87
    %144 = vmatprep.subr.mxu0 0.0
    %145 = vmatpush1.msra.mxu0 %v88
    %146 = vmatprep.subr.mxu0 0.0
    %147 = vmatpush1.msra.mxu0 0.0
    %148 = vmatprep.subr.mxu0 0.0
    %149 = vmatpush1.msra.mxu0 0.0
    %150 = vmatprep.subr.mxu0 0.0
    %151 = vmatpush1.msra.mxu0 0.0
    %152 = vmatprep.subr.mxu0 0.0
    %153 = vmatpush1.msra.mxu0 0.0
    %154 = vmatprep.subr.mxu0 0.0
    %155 = vmatpush1.msra.mxu0 0.0
    %156 = vmatprep.subr.mxu0 0.0
    %157 = vmatpush1.msra.mxu0 0.0
    %158 = vmatprep.subr.mxu0 0.0
    %159 = vmatpush1.msra.mxu0 0.0
    %160 = vmatprep.subr.mxu0 0.0
    %161 = vmatpush1.msra.mxu0 0.0
    %162 = vmatprep.subr.mxu0 0.0
    %163 = vmatpush1.msra.mxu0 0.0
    %164 = vmatprep.subr.mxu0 0.0
    %165 = vmatpush1.msra.mxu0 0.0
    %166 = vmatprep.subr.mxu0 0.0
    %167 = vmatpush1.msra.mxu0 0.0
    %168 = vmatprep.subr.mxu0 0.0
    %169 = vmatpush1.msra.mxu0 0.0
    %170 = vmatprep.subr.mxu0 0.0
    %171 = vmatpush1.msra.mxu0 0.0
    %172 = vmatprep.subr.mxu0 0.0
    %173 = vmatpush1.msra.mxu0 0.0
    %174 = vmatprep.subr.mxu0 0.0
    %175 = vmatpush1.msra.mxu0 0.0
    %176 = vmatprep.subr.mxu0 0.0
    %177 = vmatpush1.msra.mxu0 0.0
    %178 = vmatprep.subr.mxu0 0.0
    %179 = vmatpush1.msra.mxu0 0.0
    %180 = vmatprep.subr.mxu0 0.0
    %181 = vmatpush1.msra.mxu0 0.0
    %182 = vmatprep.subr.mxu0 0.0
    %183 = vmatpush1.msra.mxu0 0.0
    %184 = vmatprep.subr.mxu0 0.0
    %185 = vmatpush1.msra.mxu0 0.0
    %186 = vmatprep.subr.mxu0 0.0
    %187 = vmatpush1.msra.mxu0 0.0
    %188 = vmatprep.subr.mxu0 0.0
    %189 = vmatpush1.msra.mxu0 0.0
    %190 = vmatprep.subr.mxu0 0.0
    %191 = vmatpush1.msra.mxu0 0.0
    %192 = vmatprep.subr.mxu0 0.0
    %193 = vmatpush1.msra.mxu0 0.0
    %194 = vmatprep.subr.mxu0 0.0
    %195 = vmatpush1.msra.mxu0 0.0
    %196 = vmatprep.subr.mxu0 0.0
    %197 = vmatpush1.msra.mxu0 0.0
    %198 = vmatprep.subr.mxu0 0.0
    %199 = vmatpush1.msra.mxu0 0.0
    %200 = vmatprep.subr.mxu0 0.0
    %201 = vmatpush1.msra.mxu0 0.0
    %202 = vmatprep.mubr.f32.mxu0 0.0
    %203 = vmatmul.mubr.f32.gmra.mrb[0].mxu0 %v91
    %v204 = vpop.f32.mrb[0].mxu0
    %v205 = vadd.f32 0.0, %v204
    %v206 = vpop.f32.mrb[0].mxu0
    %207 = vmatprep.mubr.f32.mxu0 0.0
    %208 = vmatmul.mubr.f32.gmra.mrb[0].mxu0 %v94
    %v209 = vpop.f32.mrb[0].mxu0
    %v210 = vadd.f32 0.0, %v209
    %v211 = vpop.f32.mrb[0].mxu0
    %212 = vmatprep.mubr.f32.mxu0 0.0
    %213 = vmatmul.mubr.f32.gmra.mrb[0].mxu0 %v97
    %v214 = vpop.f32.mrb[0].mxu0
    %v215 = vadd.f32 0.0, %v214
    %v216 = vpop.f32.mrb[0].mxu0
    %217 = vmatprep.mubr.f32.mxu0 0.0
    %218 = vmatmul.mubr.f32.gmra.mrb[0].mxu0 %v100
    %v219 = vpop.f32.mrb[0].mxu0
    %v220 = vadd.f32 0.0, %v219
    %v221 = vpop.f32.mrb[0].mxu0
    %222 = vmatprep.mubr.f32.mxu0 0.0
    %223 = vmatmul.mubr.f32.gmra.mrb[0].mxu0 %v103
    %v224 = vpop.f32.mrb[0].mxu0
    %v225 = vadd.f32 0.0, %v224
    %v226 = vpop.f32.mrb[0].mxu0
    %227 = vmatprep.mubr.f32.mxu0 0.0
    %228 = vmatmul.mubr.f32.gmra.mrb[0].mxu0 %v106
    %v229 = vpop.f32.mrb[0].mxu0
    %v230 = vadd.f32 0.0, %v229
    %v231 = vpop.f32.mrb[0].mxu0
    %232 = vmatprep.mubr.f32.mxu0 0.0
    %233 = vmatmul.mubr.f32.gmra.mrb[0].mxu0 %v109
    %v234 = vpop.f32.mrb[0].mxu0
    %v235 = vadd.f32 0.0, %v234
    %v236 = vpop.f32.mrb[0].mxu0
    %237 = vmatprep.mubr.f32.mxu0 0.0
    %238 = vmatmul.mubr.f32.gmra.mrb[0].mxu0 %v112
    %v239 = vpop.f32.mrb[0].mxu0
    %v240 = vadd.f32 0.0, %v239
    %v241 = vpop.f32.mrb[0].mxu0
    %242 = vmatprep.mubr.f32.mxu0 0.0
    %243 = vmatmul.mubr.f32.gmra.mrb[0].mxu0 %v115
    %v244 = vpop.f32.mrb[0].mxu0
    %v245 = vadd.f32 0.0, %v244
    %v246 = vpop.f32.mrb[0].mxu0
    %247 = vmatprep.mubr.f32.mxu0 0.0
    %248 = vmatmul.mubr.f32.gmra.mrb[0].mxu0 %v118
    %v249 = vpop.f32.mrb[0].mxu0
    %v250 = vadd.f32 0.0, %v249
    %v251 = vpop.f32.mrb[0].mxu0
    %252 = vmatprep.mubr.f32.mxu0 0.0
    %253 = vmatmul.mubr.f32.gmra.mrb[0].mxu0 %v121
    %v254 = vpop.f32.mrb[0].mxu0
    %v255 = vadd.f32 0.0, %v254
    %v256 = vpop.f32.mrb[0].mxu0
    %257 = vmatprep.mubr.f32.mxu0 0.0
    %258 = vmatmul.mubr.f32.gmra.mrb[0].mxu0 %v124
    %v259 = vpop.f32.mrb[0].mxu0
    %v260 = vadd.f32 0.0, %v259
    %v261 = vpop.f32.mrb[0].mxu0
    %262 = vmatprep.mubr.f32.mxu0 0.0
    %263 = vmatmul.mubr.f32.gmra.mrb[0].mxu0 %v127
    %v264 = vpop.f32.mrb[0].mxu0
    %v265 = vadd.f32 0.0, %v264
    %v266 = vpop.f32.mrb[0].mxu0
    %267 = vmatprep.mubr.f32.mxu0 0.0
    %268 = vmatmul.mubr.f32.gmra.mrb[0].mxu0 %v130
    %v269 = vpop.f32.mrb[0].mxu0
    %v270 = vadd.f32 0.0, %v269
    %v271 = vpop.f32.mrb[0].mxu0
    %272 = vmatprep.mubr.f32.mxu0 0.0
    %273 = vmatmul.mubr.f32.gmra.mrb[0].mxu0 %v133
    %v274 = vpop.f32.mrb[0].mxu0
    %v275 = vadd.f32 0.0, %v274
    %v276 = vpop.f32.mrb[0].mxu0
    %277 = vmatprep.mubr.f32.mxu0 0.0
    %278 = vmatmul.mubr.f32.gmra.mrb[0].mxu0 %v136
    %v279 = vpop.f32.mrb[0].mxu0
    %v280 = vadd.f32 0.0, %v279
    %v281 = vpop.f32.mrb[0].mxu0
    %282 = vdwg.mxu0
    %v283 = vld [vmem:[#allocation7] sm:$0xff]
    %v284 = vld [vmem:[#allocation8] sm:$0x1]
    %v286 = vlaneseq
    %v287 = vshrl.u32 %v286, 7
    %v288 = vsub.s32 0, %v287
    %v289 = vrot.slane %v284, %v288
    %vm291 = vcmask 64512
    %v293 = vsel %vm291, %v205, 0
    %v296 = vsel %vm291, %v210, 0
    %v299 = vsel %vm291, %v215, 0
    %v302 = vsel %vm291, %v220, 0
    %v305 = vsel %vm291, %v225, 0
    %v308 = vsel %vm291, %v230, 0
    %v311 = vsel %vm291, %v235, 0
    %v314 = vsel %vm291, %v240, 0
    %v317 = vsel %vm291, %v245, 0
    %v320 = vsel %vm291, %v250, 0
    %v323 = vsel %vm291, %v255, 0
    %v326 = vsel %vm291, %v260, 0
    %v329 = vsel %vm291, %v265, 0
    %v332 = vsel %vm291, %v270, 0
    %v335 = vsel %vm291, %v275, 0
    %v338 = vsel %vm291, %v280, 0
    %340 = vmatprep.subr.mxu0 0.0
    %341 = vmatpush1.msra.mxu0 %v283
    %342 = vmatprep.subr.mxu0 0.0
    %343 = vmatpush1.msra.mxu0 0.0
    %344 = vmatprep.subr.mxu0 0.0
    %345 = vmatpush1.msra.mxu0 0.0
    %346 = vmatprep.subr.mxu0 0.0
    %347 = vmatpush1.msra.mxu0 0.0
    %348 = vmatprep.subr.mxu0 0.0
    %349 = vmatpush1.msra.mxu0 0.0
    %350 = vmatprep.subr.mxu0 0.0
    %351 = vmatpush1.msra.mxu0 0.0
    %352 = vmatprep.subr.mxu0 0.0
    %353 = vmatpush1.msra.mxu0 0.0
    %354 = vmatprep.subr.mxu0 0.0
    %355 = vmatpush1.msra.mxu0 0.0
    %356 = vmatprep.subr.mxu0 0.0
    %357 = vmatpush1.msra.mxu0 0.0
    %358 = vmatprep.subr.mxu0 0.0
    %359 = vmatpush1.msra.mxu0 0.0
    %360 = vmatprep.subr.mxu0 0.0
    %361 = vmatpush1.msra.mxu0 0.0
    %362 = vmatprep.subr.mxu0 0.0
    %363 = vmatpush1.msra.mxu0 0.0
    %364 = vmatprep.subr.mxu0 0.0
    %365 = vmatpush1.msra.mxu0 0.0
    %366 = vmatprep.subr.mxu0 0.0
    %367 = vmatpush1.msra.mxu0 0.0
    %368 = vmatprep.subr.mxu0 0.0
    %369 = vmatpush1.msra.mxu0 0.0
    %370 = vmatprep.subr.mxu0 0.0
    %371 = vmatpush1.msra.mxu0 0.0
    %372 = vmatprep.subr.mxu0 0.0
    %373 = vmatpush1.msra.mxu0 0.0
    %374 = vmatprep.subr.mxu0 0.0
    %375 = vmatpush1.msra.mxu0 0.0
    %376 = vmatprep.subr.mxu0 0.0
    %377 = vmatpush1.msra.mxu0 0.0
    %378 = vmatprep.subr.mxu0 0.0
    %379 = vmatpush1.msra.mxu0 0.0
    %380 = vmatprep.subr.mxu0 0.0
    %381 = vmatpush1.msra.mxu0 0.0
    %382 = vmatprep.subr.mxu0 0.0
    %383 = vmatpush1.msra.mxu0 0.0
    %384 = vmatprep.subr.mxu0 0.0
    %385 = vmatpush1.msra.mxu0 0.0
    %386 = vmatprep.subr.mxu0 0.0
    %387 = vmatpush1.msra.mxu0 0.0
    %388 = vmatprep.subr.mxu0 0.0
    %389 = vmatpush1.msra.mxu0 0.0
    %390 = vmatprep.subr.mxu0 0.0
    %391 = vmatpush1.msra.mxu0 0.0
    %392 = vmatprep.subr.mxu0 0.0
    %393 = vmatpush1.msra.mxu0 0.0
    %394 = vmatprep.subr.mxu0 0.0
    %395 = vmatpush1.msra.mxu0 0.0
    %396 = vmatprep.subr.mxu0 0.0
    %397 = vmatpush1.msra.mxu0 0.0
    %398 = vmatprep.subr.mxu0 0.0
    %399 = vmatpush1.msra.mxu0 0.0
    %400 = vmatprep.subr.mxu0 0.0
    %401 = vmatpush1.msra.mxu0 0.0
    %402 = vmatprep.subr.mxu0 0.0
    %403 = vmatpush1.msra.mxu0 0.0
    %404 = vmatprep.mubr.f32.mxu0 0.0
    %405 = vmatmul.mubr.f32.gmra.mrb[0].mxu0 %v293
    %v406 = vpop.f32.mrb[0].mxu0
    %v407 = vadd.f32 %v289, %v406
    %v408 = vpop.f32.mrb[0].mxu0
    %409 = vmatprep.mubr.f32.mxu0 0.0
    %410 = vmatmul.mubr.f32.gmra.mrb[0].mxu0 %v296
    %v411 = vpop.f32.mrb[0].mxu0
    %v412 = vadd.f32 %v289, %v411
    %v413 = vpop.f32.mrb[0].mxu0
    %414 = vmatprep.mubr.f32.mxu0 0.0
    %415 = vmatmul.mubr.f32.gmra.mrb[0].mxu0 %v299
    %v416 = vpop.f32.mrb[0].mxu0
    %v417 = vadd.f32 %v289, %v416
    %v418 = vpop.f32.mrb[0].mxu0
    %419 = vmatprep.mubr.f32.mxu0 0.0
    %420 = vmatmul.mubr.f32.gmra.mrb[0].mxu0 %v302
    %v421 = vpop.f32.mrb[0].mxu0
    %v422 = vadd.f32 %v289, %v421
    %v423 = vpop.f32.mrb[0].mxu0
    %424 = vmatprep.mubr.f32.mxu0 0.0
    %425 = vmatmul.mubr.f32.gmra.mrb[0].mxu0 %v305
    %v426 = vpop.f32.mrb[0].mxu0
    %v427 = vadd.f32 %v289, %v426
    %v428 = vpop.f32.mrb[0].mxu0
    %429 = vmatprep.mubr.f32.mxu0 0.0
    %430 = vmatmul.mubr.f32.gmra.mrb[0].mxu0 %v308
    %v431 = vpop.f32.mrb[0].mxu0
    %v432 = vadd.f32 %v289, %v431
    %v433 = vpop.f32.mrb[0].mxu0
    %434 = vmatprep.mubr.f32.mxu0 0.0
    %435 = vmatmul.mubr.f32.gmra.mrb[0].mxu0 %v311
    %v436 = vpop.f32.mrb[0].mxu0
    %v437 = vadd.f32 %v289, %v436
    %v438 = vpop.f32.mrb[0].mxu0
    %439 = vmatprep.mubr.f32.mxu0 0.0
    %440 = vmatmul.mubr.f32.gmra.mrb[0].mxu0 %v314
    %v441 = vpop.f32.mrb[0].mxu0
    %v442 = vadd.f32 %v289, %v441
    %v443 = vpop.f32.mrb[0].mxu0
    %444 = vmatprep.mubr.f32.mxu0 0.0
    %445 = vmatmul.mubr.f32.gmra.mrb[0].mxu0 %v317
    %v446 = vpop.f32.mrb[0].mxu0
    %v447 = vadd.f32 %v289, %v446
    %v448 = vpop.f32.mrb[0].mxu0
    %449 = vmatprep.mubr.f32.mxu0 0.0
    %450 = vmatmul.mubr.f32.gmra.mrb[0].mxu0 %v320
    %v451 = vpop.f32.mrb[0].mxu0
    %v452 = vadd.f32 %v289, %v451
    %v453 = vpop.f32.mrb[0].mxu0
    %454 = vmatprep.mubr.f32.mxu0 0.0
    %455 = vmatmul.mubr.f32.gmra.mrb[0].mxu0 %v323
    %v456 = vpop.f32.mrb[0].mxu0
    %v457 = vadd.f32 %v289, %v456
    %v458 = vpop.f32.mrb[0].mxu0
    %459 = vmatprep.mubr.f32.mxu0 0.0
    %460 = vmatmul.mubr.f32.gmra.mrb[0].mxu0 %v326
    %v461 = vpop.f32.mrb[0].mxu0
    %v462 = vadd.f32 %v289, %v461
    %v463 = vpop.f32.mrb[0].mxu0
    %464 = vmatprep.mubr.f32.mxu0 0.0
    %465 = vmatmul.mubr.f32.gmra.mrb[0].mxu0 %v329
    %v466 = vpop.f32.mrb[0].mxu0
    %v467 = vadd.f32 %v289, %v466
    %v468 = vpop.f32.mrb[0].mxu0
    %469 = vmatprep.mubr.f32.mxu0 0.0
    %470 = vmatmul.mubr.f32.gmra.mrb[0].mxu0 %v332
    %v471 = vpop.f32.mrb[0].mxu0
    %v472 = vadd.f32 %v289, %v471
    %v473 = vpop.f32.mrb[0].mxu0
    %474 = vmatprep.mubr.f32.mxu0 0.0
    %475 = vmatmul.mubr.f32.gmra.mrb[0].mxu0 %v335
    %v476 = vpop.f32.mrb[0].mxu0
    %v477 = vadd.f32 %v289, %v476
    %v478 = vpop.f32.mrb[0].mxu0
    %479 = vmatprep.mubr.f32.mxu0 0.0
    %480 = vmatmul.mubr.f32.gmra.mrb[0].mxu0 %v338
    %v481 = vpop.f32.mrb[0].mxu0
    %v482 = vadd.f32 %v289, %v481
    %v483 = vpop.f32.mrb[0].mxu0
    %484 = vdwg.mxu0
    %485 = vst [vmem:[#allocation10] sm:$0xff] %v407
    %486 = vst [vmem:[#allocation10 + $0x8] sm:$0xff] %v412
    %487 = vst [vmem:[#allocation10 + $0x10] sm:$0xff] %v417
    %488 = vst [vmem:[#allocation10 + $0x18] sm:$0xff] %v422
    %489 = vst [vmem:[#allocation10 + $0x20] sm:$0xff] %v427
    %490 = vst [vmem:[#allocation10 + $0x28] sm:$0xff] %v432
    %491 = vst [vmem:[#allocation10 + $0x30] sm:$0xff] %v437
    %492 = vst [vmem:[#allocation10 + $0x38] sm:$0xff] %v442
    %493 = vst [vmem:[#allocation10 + $0x40] sm:$0xff] %v447
    %494 = vst [vmem:[#allocation10 + $0x48] sm:$0xff] %v452
    %495 = vst [vmem:[#allocation10 + $0x50] sm:$0xff] %v457
    %496 = vst [vmem:[#allocation10 + $0x58] sm:$0xff] %v462
    %497 = vst [vmem:[#allocation10 + $0x60] sm:$0xff] %v467
    %498 = vst [vmem:[#allocation10 + $0x68] sm:$0xff] %v472
    %499 = vst [vmem:[#allocation10 + $0x70] sm:$0xff] %v477
    %500 = vst [vmem:[#allocation10 + $0x78] sm:$0xff] %v482
    // Predicated region
    $region34: #{tpu_custom_call.1} parent=1 // pred_check
      _
    $region35: #{tpu_custom_call.1} parent=1 // pred_check_branch
      %502 = sbr.rel (0) target = $region37
    $region36: #{tpu_custom_call.1} parent=1 // pred_region
      %s504 = ssub.s32 2048, 2048
      %505 = vsyncadd [#allocation4], %s504
      %s506 = sshll.u32 [#allocation10], 4
      %s507 = int_to_ptr.vmem [resolvable:$true] %s506
      %512 = dma.vmem_to_hbm [thread:$0]  %s507, 2048, %s4, [#allocation4], 128, 128, 8
    $region37: #{tpu_custom_call.1} parent=1 // pred_fallthru
      _
    // Predicated region
    $region38: #{tpu_custom_call.1} parent=1 // pred_check
      _
    $region39: #{tpu_custom_call.1} parent=1 // pred_check_branch
      %514 = sbr.rel (0) target = $region41
    $region40: #{tpu_custom_call.1} parent=1 // pred_region
      %515 = dma.done [#allocation4], 2048
    $region41: #{tpu_custom_call.1} parent=1 // pred_fallthru
      _
    %516 = vsyncpa [#allocation3], 1
    %517 = vsyncpa [#allocation6], 1
    %518 = vsyncpa [#allocation9], 1
    %519 = vsyncpa [#allocation4], 1

</llo_original>
